<compile_context>
chip_gen: v6e
topology: v6e:2x2x1
jax: 0.10.0
libtpu: 0.0.40
codegen_flags: <defaults>
</compile_context>

<pallas_src>
import jax
import jax.numpy as jnp
from jax.experimental import pallas as pl
from jax.experimental.pallas import tpu as pltpu  # noqa: F401  (kept for TPU-specific use)

# ----------------------------- config (small, deterministic) -----------------------------
T = 3            # number of sentences (time steps)
B = 2            # batch size
L = 8            # max words per sentence
VOCAB = 32       # vocabulary size
ENTS = 4         # opt.ents
ESIZE = 32       # opt.eSize
PRELU_A = 0.25   # nn.PReLU default init (deterministic)
EPS = 1e-8


# ----------------------------- Pallas kernel: recurrent entity update --------------------
def entnet_kernel(sent_ref, keys_ref, ent0_ref, u_ref, v_ref, w_ref,
                  ent_out_ref, joint_out_ref):
    """Single-invocation kernel: the whole T-step recurrence runs in-kernel, fully
    unrolled (T is static and tiny), with every operand VMEM-resident."""
    Tn, Bn, E = sent_ref.shape
    N = keys_ref.shape[1]

    sent = sent_ref[...]                            # (T, B, E)
    k = keys_ref[...]                               # (B, N, E) entity keys (time-invariant)
    h = ent0_ref[...].astype(jnp.float32)           # (B, N, E) recurrent state (value-carried)
    U = u_ref[...]
    V = v_ref[...]
    W = w_ref[...]

    # ---- hoisted, time-invariant work (off the serial recurrence path) ----
    # keys @ V : one (B*N, E) x (E, E) MXU call, constant over t.
    kV = jnp.dot(k.reshape(Bn * N, E), V,
                 preferred_element_type=jnp.float32).reshape(Bn, N, E)
    # sentence @ W for ALL timesteps : one better-filled (T*B, E) x (E, E) MXU call.
    sW_all = jnp.dot(sent.reshape(Tn * Bn, E), W,
                     preferred_element_type=jnp.float32).reshape(Tn, Bn, E)
    # selector "s . k" half for every timestep (k does not change over t).
    sk_all = [jnp.sum(sent[t][:, None, :] * k, axis=-1) for t in range(Tn)]   # each (B, N)

    acts = None
    # Fully-unrolled in-kernel recurrence: only the h-dependent work stays on the
    # serial path (one small flattened MXU matmul + VPU/EUP elementwise).
    for t in range(Tn):                              # T is static -> straight-line code
        s = sent[t]                                  # (B, E)  current sentence embedding

        # ---- EntitySelector: gate activations & attention ----
        sh = jnp.sum(s[:, None, :] * h, axis=-1)     # (B, N)  data-dependent half
        acts = sh + sk_all[t]                        # (B, N)
        attn = jax.nn.sigmoid(acts)                  # gates

        # ---- EntityUpdater: candidate memory ----
        hU = jnp.dot(h.reshape(Bn * N, E), U,
                     preferred_element_type=jnp.float32).reshape(Bn, N, E)
        pre = hU + kV + sW_all[t][:, None, :]
        cand = jnp.where(pre > 0, pre, PRELU_A * pre)            # PReLU (fixed slope)

        h_new = h + attn[:, :, None] * cand
        inv_norm = jax.lax.rsqrt(jnp.sum(h_new * h_new, axis=-1, keepdims=True) + EPS)
        h = h_new * inv_norm                                     # normalized entities

    # ---- outputs from the last time step ----
    n_dist = jax.nn.softmax(acts, axis=1)                        # (B, N)
    ent_out_ref[...] = h.astype(ent_out_ref.dtype)
    joint_out_ref[...] = jnp.sum(n_dist[:, :, None] * h, axis=1).astype(joint_out_ref.dtype)


def entnet_forward(sent_embs, keys, entities_init, U, V, W):
    """sent_embs: (T,B,E) f32, keys/entities_init: (B,N,E) f32, U/V/W: (E,E) f32."""
    Tn, Bn, E = sent_embs.shape
    _, N, _ = keys.shape
    # No grid: one kernel invocation, all arrays resident in VMEM (total footprint is a
    # few KiB, far under the VMEM budget on v5e/v6e/v7x).
    return pl.pallas_call(
        entnet_kernel,
        out_shape=(jax.ShapeDtypeStruct((Bn, N, E), jnp.float32),   # entities
                   jax.ShapeDtypeStruct((Bn, E), jnp.float32)),     # joint
    )(sent_embs, keys, entities_init, U, V, W)


# ----------------------------- plain-JAX glue (embedding lookups etc.) -------------------
def encode_sentences(sentences, lengths, word_emb, pos_mask):
    """Positional-mask sentence encoder (glue: gather + masked sum).
    sentences: (T,B,L) int32, lengths: (T,B) int32 -> (T,B,E) f32."""
    emb = word_emb[sentences]                                   # (T,B,L,E)
    wpos = jnp.arange(L)[None, None, :]                         # (1,1,L)
    valid = (wpos < lengths[:, :, None]).astype(jnp.float32)    # (T,B,L)
    weighted = emb * pos_mask[None, None, :, :] * valid[..., None]
    return jnp.sum(weighted, axis=2)                            # (T,B,E)


if __name__ == "__main__":
    key = jax.random.PRNGKey(0)
    k_we, k_pm, k_ke, k_u, k_v, k_w, k_sent, k_len = jax.random.split(key, 8)

    # deterministic parameter init (shapes from module __init__)
    word_emb = 0.1 * jax.random.normal(k_we, (VOCAB, ESIZE), jnp.float32)
    pos_mask = 0.1 * jax.random.normal(k_pm, (L, ESIZE), jnp.float32)      # SentenceEncoder mask
    key_init = 0.1 * jax.random.normal(k_ke, (ENTS, ESIZE), jnp.float32)   # nn.Embedding(ents,eSize)
    U = 0.1 * jax.random.normal(k_u, (ESIZE, ESIZE), jnp.float32)
    V = 0.1 * jax.random.normal(k_v, (ESIZE, ESIZE), jnp.float32)
    W = 0.1 * jax.random.normal(k_w, (ESIZE, ESIZE), jnp.float32)

    # deterministic example inputs
    sentences = jax.random.randint(k_sent, (T, B, L), 0, VOCAB, jnp.int32)
    lengths = jax.random.randint(k_len, (T, B), 3, L + 1, jnp.int32)

    # initialize_entities: keys = entities = key_init[range(ents)] expanded over batch
    keys = jnp.broadcast_to(key_init[None, :, :], (B, ENTS, ESIZE)).astype(jnp.float32)
    entities_init = keys

    sent_embs = encode_sentences(sentences, lengths, word_emb, pos_mask)

    entities, joint = jax.jit(entnet_forward)(sent_embs, keys, entities_init, U, V, W)
    jax.block_until_ready((entities, joint))

    assert entities.shape == (B, ENTS, ESIZE)
    assert joint.shape == (B, ESIZE)
    # sel_loss = 0 (entity_labels is None in this synthetic run)
    print("KERNEL_OK")
</pallas_src>

<mosaic_0001>
module attributes {stable_mosaic.version = 11 : i64} {
  func.func @entnet_kernel(%arg0: memref<3x2x32xf32, #tpu.memory_space<vmem>>, %arg1: memref<2x4x32xf32, #tpu.memory_space<vmem>>, %arg2: memref<2x4x32xf32, #tpu.memory_space<vmem>>, %arg3: memref<32x32xf32, #tpu.memory_space<vmem>>, %arg4: memref<32x32xf32, #tpu.memory_space<vmem>>, %arg5: memref<32x32xf32, #tpu.memory_space<vmem>>, %arg6: memref<2x4x32xf32, #tpu.memory_space<vmem>>, %arg7: memref<2x32xf32, #tpu.memory_space<vmem>>) attributes {dimension_semantics = [], scalar_prefetch = 0 : i64, scratch_operands = 0 : i64, tpu.core_type = #tpu.core_type<tc>} {
    %c0 = arith.constant 0 : index
    %c0_0 = arith.constant 0 : index
    %c0_1 = arith.constant 0 : index
    %0 = vector.load %arg0[%c0, %c0_0, %c0_1] : memref<3x2x32xf32, #tpu.memory_space<vmem>>, vector<3x2x32xf32>
    %c0_2 = arith.constant 0 : index
    %c0_3 = arith.constant 0 : index
    %c0_4 = arith.constant 0 : index
    %1 = vector.load %arg1[%c0_2, %c0_3, %c0_4] : memref<2x4x32xf32, #tpu.memory_space<vmem>>, vector<2x4x32xf32>
    %c0_5 = arith.constant 0 : index
    %c0_6 = arith.constant 0 : index
    %c0_7 = arith.constant 0 : index
    %2 = vector.load %arg2[%c0_5, %c0_6, %c0_7] : memref<2x4x32xf32, #tpu.memory_space<vmem>>, vector<2x4x32xf32>
    %c0_8 = arith.constant 0 : index
    %c0_9 = arith.constant 0 : index
    %3 = vector.load %arg3[%c0_8, %c0_9] : memref<32x32xf32, #tpu.memory_space<vmem>>, vector<32x32xf32>
    %c0_10 = arith.constant 0 : index
    %c0_11 = arith.constant 0 : index
    %4 = vector.load %arg4[%c0_10, %c0_11] : memref<32x32xf32, #tpu.memory_space<vmem>>, vector<32x32xf32>
    %c0_12 = arith.constant 0 : index
    %c0_13 = arith.constant 0 : index
    %5 = vector.load %arg5[%c0_12, %c0_13] : memref<32x32xf32, #tpu.memory_space<vmem>>, vector<32x32xf32>
    %6 = vector.shape_cast %1 : vector<2x4x32xf32> to vector<8x32xf32>
    %cst = arith.constant dense<0.000000e+00> : vector<8x32xf32>
    %7 = tpu.matmul %6, %4, %cst {dimension_numbers = #tpu.dot_dimension_numbers<[1], [0], [0], [1], [0, 0, 1, 1], [], []>} : vector<8x32xf32>, vector<32x32xf32>, vector<8x32xf32> -> vector<8x32xf32>
    %8 = vector.shape_cast %7 : vector<8x32xf32> to vector<2x4x32xf32>
    %9 = vector.shape_cast %0 : vector<3x2x32xf32> to vector<6x32xf32>
    %cst_14 = arith.constant dense<0.000000e+00> : vector<6x32xf32>
    %10 = tpu.matmul %9, %5, %cst_14 {dimension_numbers = #tpu.dot_dimension_numbers<[1], [0], [0], [1], [0, 0, 1, 1], [], []>} : vector<6x32xf32>, vector<32x32xf32>, vector<6x32xf32> -> vector<6x32xf32>
    %11 = vector.shape_cast %10 : vector<6x32xf32> to vector<3x2x32xf32>
    %12 = vector.extract_strided_slice %0 {offsets = [0, 0, 0], sizes = [1, 2, 32], strides = [1, 1, 1]} : vector<3x2x32xf32> to vector<1x2x32xf32>
    %13 = vector.shape_cast %12 : vector<1x2x32xf32> to vector<2x32xf32>
    %14 = vector.shape_cast %13 : vector<2x32xf32> to vector<2x1x32xf32>
    %15 = vector.broadcast %14 : vector<2x1x32xf32> to vector<2x4x32xf32>
    %16 = arith.mulf %15, %1 : vector<2x4x32xf32>
    %cst_15 = arith.constant dense<0.000000e+00> : vector<2x4xf32>
    %17 = vector.multi_reduction <add>, %16, %cst_15 [2] : vector<2x4x32xf32> to vector<2x4xf32>
    %18 = vector.extract_strided_slice %0 {offsets = [1, 0, 0], sizes = [1, 2, 32], strides = [1, 1, 1]} : vector<3x2x32xf32> to vector<1x2x32xf32>
    %19 = vector.shape_cast %18 : vector<1x2x32xf32> to vector<2x32xf32>
    %20 = vector.shape_cast %19 : vector<2x32xf32> to vector<2x1x32xf32>
    %21 = vector.broadcast %20 : vector<2x1x32xf32> to vector<2x4x32xf32>
    %22 = arith.mulf %21, %1 : vector<2x4x32xf32>
    %cst_16 = arith.constant dense<0.000000e+00> : vector<2x4xf32>
    %23 = vector.multi_reduction <add>, %22, %cst_16 [2] : vector<2x4x32xf32> to vector<2x4xf32>
    %24 = vector.extract_strided_slice %0 {offsets = [2, 0, 0], sizes = [1, 2, 32], strides = [1, 1, 1]} : vector<3x2x32xf32> to vector<1x2x32xf32>
    %25 = vector.shape_cast %24 : vector<1x2x32xf32> to vector<2x32xf32>
    %26 = vector.shape_cast %25 : vector<2x32xf32> to vector<2x1x32xf32>
    %27 = vector.broadcast %26 : vector<2x1x32xf32> to vector<2x4x32xf32>
    %28 = arith.mulf %27, %1 : vector<2x4x32xf32>
    %cst_17 = arith.constant dense<0.000000e+00> : vector<2x4xf32>
    %29 = vector.multi_reduction <add>, %28, %cst_17 [2] : vector<2x4x32xf32> to vector<2x4xf32>
    %30 = vector.extract_strided_slice %0 {offsets = [0, 0, 0], sizes = [1, 2, 32], strides = [1, 1, 1]} : vector<3x2x32xf32> to vector<1x2x32xf32>
    %31 = vector.shape_cast %30 : vector<1x2x32xf32> to vector<2x32xf32>
    %32 = vector.shape_cast %31 : vector<2x32xf32> to vector<2x1x32xf32>
    %33 = vector.broadcast %32 : vector<2x1x32xf32> to vector<2x4x32xf32>
    %34 = arith.mulf %33, %2 : vector<2x4x32xf32>
    %cst_18 = arith.constant dense<0.000000e+00> : vector<2x4xf32>
    %35 = vector.multi_reduction <add>, %34, %cst_18 [2] : vector<2x4x32xf32> to vector<2x4xf32>
    %36 = arith.addf %35, %17 : vector<2x4xf32>
    %37 = arith.negf %36 : vector<2x4xf32>
    %38 = math.exp %37 : vector<2x4xf32>
    %cst_19 = arith.constant 1.000000e+00 : f32
    %39 = vector.broadcast %cst_19 : f32 to vector<2x4xf32>
    %40 = arith.addf %39, %38 : vector<2x4xf32>
    %41 = arith.divf %39, %40 : vector<2x4xf32>
    %42 = vector.shape_cast %2 : vector<2x4x32xf32> to vector<8x32xf32>
    %cst_20 = arith.constant dense<0.000000e+00> : vector<8x32xf32>
    %43 = tpu.matmul %42, %3, %cst_20 {dimension_numbers = #tpu.dot_dimension_numbers<[1], [0], [0], [1], [0, 0, 1, 1], [], []>} : vector<8x32xf32>, vector<32x32xf32>, vector<8x32xf32> -> vector<8x32xf32>
    %44 = vector.shape_cast %43 : vector<8x32xf32> to vector<2x4x32xf32>
    %45 = arith.addf %44, %8 : vector<2x4x32xf32>
    %46 = vector.extract_strided_slice %11 {offsets = [0, 0, 0], sizes = [1, 2, 32], strides = [1, 1, 1]} : vector<3x2x32xf32> to vector<1x2x32xf32>
    %47 = vector.shape_cast %46 : vector<1x2x32xf32> to vector<2x32xf32>
    %48 = vector.shape_cast %47 : vector<2x32xf32> to vector<2x1x32xf32>
    %49 = vector.broadcast %48 : vector<2x1x32xf32> to vector<2x4x32xf32>
    %50 = arith.addf %45, %49 : vector<2x4x32xf32>
    %cst_21 = arith.constant 0.000000e+00 : f32
    %51 = vector.broadcast %cst_21 : f32 to vector<2x4x32xf32>
    %52 = arith.cmpf ogt, %50, %51 : vector<2x4x32xf32>
    %cst_22 = arith.constant 2.500000e-01 : f32
    %53 = vector.broadcast %cst_22 : f32 to vector<2x4x32xf32>
    %54 = arith.mulf %53, %50 : vector<2x4x32xf32>
    %55 = arith.select %52, %50, %54 : vector<2x4x32xi1>, vector<2x4x32xf32>
    %56 = vector.shape_cast %41 : vector<2x4xf32> to vector<2x4x1xf32>
    %57 = vector.broadcast %56 : vector<2x4x1xf32> to vector<2x4x32xf32>
    %58 = arith.mulf %57, %55 : vector<2x4x32xf32>
    %59 = arith.addf %2, %58 : vector<2x4x32xf32>
    %60 = arith.mulf %59, %59 : vector<2x4x32xf32>
    %cst_23 = arith.constant dense<0.000000e+00> : vector<2x4xf32>
    %61 = vector.multi_reduction <add>, %60, %cst_23 [2] : vector<2x4x32xf32> to vector<2x4xf32>
    %62 = vector.shape_cast %61 : vector<2x4xf32> to vector<2x4x1xf32>
    %cst_24 = arith.constant 9.99999993E-9 : f32
    %63 = vector.broadcast %cst_24 : f32 to vector<2x4x1xf32>
    %64 = arith.addf %62, %63 : vector<2x4x1xf32>
    %65 = math.rsqrt %64 : vector<2x4x1xf32>
    %66 = vector.broadcast %65 : vector<2x4x1xf32> to vector<2x4x32xf32>
    %67 = arith.mulf %59, %66 : vector<2x4x32xf32>
    %68 = vector.extract_strided_slice %0 {offsets = [1, 0, 0], sizes = [1, 2, 32], strides = [1, 1, 1]} : vector<3x2x32xf32> to vector<1x2x32xf32>
    %69 = vector.shape_cast %68 : vector<1x2x32xf32> to vector<2x32xf32>
    %70 = vector.shape_cast %69 : vector<2x32xf32> to vector<2x1x32xf32>
    %71 = vector.broadcast %70 : vector<2x1x32xf32> to vector<2x4x32xf32>
    %72 = arith.mulf %71, %67 : vector<2x4x32xf32>
    %cst_25 = arith.constant dense<0.000000e+00> : vector<2x4xf32>
    %73 = vector.multi_reduction <add>, %72, %cst_25 [2] : vector<2x4x32xf32> to vector<2x4xf32>
    %74 = arith.addf %73, %23 : vector<2x4xf32>
    %75 = arith.negf %74 : vector<2x4xf32>
    %76 = math.exp %75 : vector<2x4xf32>
    %cst_26 = arith.constant 1.000000e+00 : f32
    %77 = vector.broadcast %cst_26 : f32 to vector<2x4xf32>
    %78 = arith.addf %77, %76 : vector<2x4xf32>
    %79 = arith.divf %77, %78 : vector<2x4xf32>
    %80 = vector.shape_cast %67 : vector<2x4x32xf32> to vector<8x32xf32>
    %cst_27 = arith.constant dense<0.000000e+00> : vector<8x32xf32>
    %81 = tpu.matmul %80, %3, %cst_27 {dimension_numbers = #tpu.dot_dimension_numbers<[1], [0], [0], [1], [0, 0, 1, 1], [], []>} : vector<8x32xf32>, vector<32x32xf32>, vector<8x32xf32> -> vector<8x32xf32>
    %82 = vector.shape_cast %81 : vector<8x32xf32> to vector<2x4x32xf32>
    %83 = arith.addf %82, %8 : vector<2x4x32xf32>
    %84 = vector.extract_strided_slice %11 {offsets = [1, 0, 0], sizes = [1, 2, 32], strides = [1, 1, 1]} : vector<3x2x32xf32> to vector<1x2x32xf32>
    %85 = vector.shape_cast %84 : vector<1x2x32xf32> to vector<2x32xf32>
    %86 = vector.shape_cast %85 : vector<2x32xf32> to vector<2x1x32xf32>
    %87 = vector.broadcast %86 : vector<2x1x32xf32> to vector<2x4x32xf32>
    %88 = arith.addf %83, %87 : vector<2x4x32xf32>
    %cst_28 = arith.constant 0.000000e+00 : f32
    %89 = vector.broadcast %cst_28 : f32 to vector<2x4x32xf32>
    %90 = arith.cmpf ogt, %88, %89 : vector<2x4x32xf32>
    %cst_29 = arith.constant 2.500000e-01 : f32
    %91 = vector.broadcast %cst_29 : f32 to vector<2x4x32xf32>
    %92 = arith.mulf %91, %88 : vector<2x4x32xf32>
    %93 = arith.select %90, %88, %92 : vector<2x4x32xi1>, vector<2x4x32xf32>
    %94 = vector.shape_cast %79 : vector<2x4xf32> to vector<2x4x1xf32>
    %95 = vector.broadcast %94 : vector<2x4x1xf32> to vector<2x4x32xf32>
    %96 = arith.mulf %95, %93 : vector<2x4x32xf32>
    %97 = arith.addf %67, %96 : vector<2x4x32xf32>
    %98 = arith.mulf %97, %97 : vector<2x4x32xf32>
    %cst_30 = arith.constant dense<0.000000e+00> : vector<2x4xf32>
    %99 = vector.multi_reduction <add>, %98, %cst_30 [2] : vector<2x4x32xf32> to vector<2x4xf32>
    %100 = vector.shape_cast %99 : vector<2x4xf32> to vector<2x4x1xf32>
    %cst_31 = arith.constant 9.99999993E-9 : f32
    %101 = vector.broadcast %cst_31 : f32 to vector<2x4x1xf32>
    %102 = arith.addf %100, %101 : vector<2x4x1xf32>
    %103 = math.rsqrt %102 : vector<2x4x1xf32>
    %104 = vector.broadcast %103 : vector<2x4x1xf32> to vector<2x4x32xf32>
    %105 = arith.mulf %97, %104 : vector<2x4x32xf32>
    %106 = vector.extract_strided_slice %0 {offsets = [2, 0, 0], sizes = [1, 2, 32], strides = [1, 1, 1]} : vector<3x2x32xf32> to vector<1x2x32xf32>
    %107 = vector.shape_cast %106 : vector<1x2x32xf32> to vector<2x32xf32>
    %108 = vector.shape_cast %107 : vector<2x32xf32> to vector<2x1x32xf32>
    %109 = vector.broadcast %108 : vector<2x1x32xf32> to vector<2x4x32xf32>
    %110 = arith.mulf %109, %105 : vector<2x4x32xf32>
    %cst_32 = arith.constant dense<0.000000e+00> : vector<2x4xf32>
    %111 = vector.multi_reduction <add>, %110, %cst_32 [2] : vector<2x4x32xf32> to vector<2x4xf32>
    %112 = arith.addf %111, %29 : vector<2x4xf32>
    %113 = arith.negf %112 : vector<2x4xf32>
    %114 = math.exp %113 : vector<2x4xf32>
    %cst_33 = arith.constant 1.000000e+00 : f32
    %115 = vector.broadcast %cst_33 : f32 to vector<2x4xf32>
    %116 = arith.addf %115, %114 : vector<2x4xf32>
    %117 = arith.divf %115, %116 : vector<2x4xf32>
    %118 = vector.shape_cast %105 : vector<2x4x32xf32> to vector<8x32xf32>
    %cst_34 = arith.constant dense<0.000000e+00> : vector<8x32xf32>
    %119 = tpu.matmul %118, %3, %cst_34 {dimension_numbers = #tpu.dot_dimension_numbers<[1], [0], [0], [1], [0, 0, 1, 1], [], []>} : vector<8x32xf32>, vector<32x32xf32>, vector<8x32xf32> -> vector<8x32xf32>
    %120 = vector.shape_cast %119 : vector<8x32xf32> to vector<2x4x32xf32>
    %121 = arith.addf %120, %8 : vector<2x4x32xf32>
    %122 = vector.extract_strided_slice %11 {offsets = [2, 0, 0], sizes = [1, 2, 32], strides = [1, 1, 1]} : vector<3x2x32xf32> to vector<1x2x32xf32>
    %123 = vector.shape_cast %122 : vector<1x2x32xf32> to vector<2x32xf32>
    %124 = vector.shape_cast %123 : vector<2x32xf32> to vector<2x1x32xf32>
    %125 = vector.broadcast %124 : vector<2x1x32xf32> to vector<2x4x32xf32>
    %126 = arith.addf %121, %125 : vector<2x4x32xf32>
    %cst_35 = arith.constant 0.000000e+00 : f32
    %127 = vector.broadcast %cst_35 : f32 to vector<2x4x32xf32>
    %128 = arith.cmpf ogt, %126, %127 : vector<2x4x32xf32>
    %cst_36 = arith.constant 2.500000e-01 : f32
    %129 = vector.broadcast %cst_36 : f32 to vector<2x4x32xf32>
    %130 = arith.mulf %129, %126 : vector<2x4x32xf32>
    %131 = arith.select %128, %126, %130 : vector<2x4x32xi1>, vector<2x4x32xf32>
    %132 = vector.shape_cast %117 : vector<2x4xf32> to vector<2x4x1xf32>
    %133 = vector.broadcast %132 : vector<2x4x1xf32> to vector<2x4x32xf32>
    %134 = arith.mulf %133, %131 : vector<2x4x32xf32>
    %135 = arith.addf %105, %134 : vector<2x4x32xf32>
    %136 = arith.mulf %135, %135 : vector<2x4x32xf32>
    %cst_37 = arith.constant dense<0.000000e+00> : vector<2x4xf32>
    %137 = vector.multi_reduction <add>, %136, %cst_37 [2] : vector<2x4x32xf32> to vector<2x4xf32>
    %138 = vector.shape_cast %137 : vector<2x4xf32> to vector<2x4x1xf32>
    %cst_38 = arith.constant 9.99999993E-9 : f32
    %139 = vector.broadcast %cst_38 : f32 to vector<2x4x1xf32>
    %140 = arith.addf %138, %139 : vector<2x4x1xf32>
    %141 = math.rsqrt %140 : vector<2x4x1xf32>
    %142 = vector.broadcast %141 : vector<2x4x1xf32> to vector<2x4x32xf32>
    %143 = arith.mulf %135, %142 : vector<2x4x32xf32>
    %cst_39 = arith.constant dense<0xFF800000> : vector<2xf32>
    %144 = vector.multi_reduction <maximumf>, %112, %cst_39 [1] : vector<2x4xf32> to vector<2xf32>
    %cst_40 = arith.constant 0xFF800000 : f32
    %145 = vector.broadcast %cst_40 : f32 to vector<2xf32>
    %146 = arith.maximumf %145, %144 : vector<2xf32>
    %147 = vector.shape_cast %146 : vector<2xf32> to vector<2x1xf32>
    %148 = vector.broadcast %147 : vector<2x1xf32> to vector<2x4xf32>
    %149 = arith.subf %112, %148 : vector<2x4xf32>
    %150 = math.exp %149 : vector<2x4xf32>
    %cst_41 = arith.constant dense<0.000000e+00> : vector<2xf32>
    %151 = vector.multi_reduction <add>, %150, %cst_41 [1] : vector<2x4xf32> to vector<2xf32>
    %152 = vector.shape_cast %151 : vector<2xf32> to vector<2x1xf32>
    %153 = vector.broadcast %152 : vector<2x1xf32> to vector<2x4xf32>
    %154 = arith.divf %150, %153 : vector<2x4xf32>
    %c0_42 = arith.constant 0 : index
    %c0_43 = arith.constant 0 : index
    %c0_44 = arith.constant 0 : index
    %155 = vector.load %arg6[%c0_42, %c0_43, %c0_44] : memref<2x4x32xf32, #tpu.memory_space<vmem>>, vector<2x4x32xf32>
    tpu.vector_store %arg6[%c0_42, %c0_43, %c0_44], %143 {strides = array<i32>} : memref<2x4x32xf32, #tpu.memory_space<vmem>>, vector<2x4x32xf32>,
    %156 = vector.shape_cast %154 : vector<2x4xf32> to vector<2x4x1xf32>
    %157 = vector.broadcast %156 : vector<2x4x1xf32> to vector<2x4x32xf32>
    %158 = arith.mulf %157, %143 : vector<2x4x32xf32>
    %cst_45 = arith.constant dense<0.000000e+00> : vector<2x32xf32>
    %159 = vector.multi_reduction <add>, %158, %cst_45 [1] : vector<2x4x32xf32> to vector<2x32xf32>
    %c0_46 = arith.constant 0 : index
    %c0_47 = arith.constant 0 : index
    %160 = vector.load %arg7[%c0_46, %c0_47] : memref<2x32xf32, #tpu.memory_space<vmem>>, vector<2x32xf32>
    tpu.vector_store %arg7[%c0_46, %c0_47], %159 {strides = array<i32>} : memref<2x32xf32, #tpu.memory_space<vmem>>, vector<2x32xf32>,
    return
  }
}

</mosaic_0001>

<llo_original>
// kernel: entnet_forward.1
$region0: #{entnet_forward.1}
  #allocation0 [shape = 'u32[]', space=smem, size = 0x4, offset = 0x4, fixed_abs, tag = 'smem constant byte address 0x4 - core index']
  #allocation1 [shape = 'u32[144,128]{1,0:T(1,128)}', space=vmem, size = 0x12000, scoped, tag = 'internal scratch']
  %s0 = inlined_call_operand.hbm [shape: f32[3,2,32], index: 0, kind: input, shape index: {}]
  %s1 = inlined_call_operand.hbm [shape: f32[2,4,32], index: 1, kind: input, shape index: {}]
  %s2 = inlined_call_operand.hbm [shape: f32[2,4,32], index: 2, kind: input, shape index: {}]
  %s3 = inlined_call_operand.hbm [shape: f32[32,32], index: 3, kind: input, shape index: {}]
  %s4 = inlined_call_operand.hbm [shape: f32[32,32], index: 4, kind: input, shape index: {}]
  %s5 = inlined_call_operand.hbm [shape: f32[32,32], index: 5, kind: input, shape index: {}]
  %s6 = inlined_call_operand.hbm [shape: f32[2,4,32], index: 6, kind: output, shape index: {0}]
  %s7 = inlined_call_operand.hbm [shape: f32[2,32], index: 7, kind: output, shape index: {1}]
  %8 = xla_tuple %s6, %s7
  %s9 = sld [smem:[#allocation0]]
  $region66: #{entnet_forward.1} parent=0
    _
  %s11 = ssub.s32 1, %s9
  %s12 = scalar_select 0, %s11, %s9
  $region1: #{entnet_forward.1} parent=0
    #allocation2 [shape = 'u8[3072]{0}', space=vmem, size = 0xc00, scoped, tag = 'input window, operand 0, single buffered']
    #allocation3 [shape = 's32[1]{0}', space=sflag, size = 0x4, scoped, tag = 'scoped memory for entnet_forward.1']
    #allocation4 [shape = 's32[1]{0}', space=sflag, size = 0x4, scoped, tag = 'scoped memory for entnet_forward.1']
    #allocation5 [shape = 'u8[4096]{0}', space=vmem, size = 0x1000, scoped, tag = 'input window, operand 1, single buffered']
    #allocation6 [shape = 's32[1]{0}', space=sflag, size = 0x4, scoped, tag = 'scoped memory for entnet_forward.1']
    #allocation7 [shape = 'u8[4096]{0}', space=vmem, size = 0x1000, scoped, tag = 'input window, operand 2, single buffered']
    #allocation8 [shape = 'u8[16384]{0}', space=vmem, size = 0x4000, scoped, tag = 'input window, operand 3, single buffered']
    #allocation9 [shape = 's32[1]{0}', space=sflag, size = 0x4, scoped, tag = 'scoped memory for entnet_forward.1']
    #allocation10 [shape = 'u8[16384]{0}', space=vmem, size = 0x4000, scoped, tag = 'input window, operand 4, single buffered']
    #allocation11 [shape = 'u8[16384]{0}', space=vmem, size = 0x4000, scoped, tag = 'input window, operand 5, single buffered']
    #allocation12 [shape = 's32[1]{0}', space=sflag, size = 0x4, scoped, tag = 'scoped memory for entnet_forward.1']
    #allocation13 [shape = 'u8[4096]{0}', space=vmem, size = 0x1000, scoped, tag = 'output window, operand 0, single buffered']
    #allocation14 [shape = 'u8[1024]{0}', space=vmem, size = 0x400, scoped, tag = 'output window, operand 1, single buffered']
    #allocation15 [shape = 's32[1]{0}', space=sflag, size = 0x4, scoped, tag = 'scoped memory for entnet_forward.1']
    %13 = vsyncpa [#allocation3], 0
    %14 = vsyncpa [#allocation6], 0
    %15 = vsyncpa [#allocation9], 0
    %16 = vsyncpa [#allocation12], 0
    %17 = vsyncpa [#allocation4], 0
    %18 = vsyncpa [#allocation15], 0
    // Predicated region
    $region2: #{entnet_forward.1} parent=1 // pred_check
      _
    $region3: #{entnet_forward.1} parent=1 // pred_check_branch
      %20 = sbr.rel (0) target = $region5
    $region4: #{entnet_forward.1} parent=1 // pred_region
      %s22 = ssub.s32 96, 96
      %23 = vsyncadd [#allocation3], %s22
      %s24 = sshll.u32 [#allocation2], 4
      %s25 = int_to_ptr.vmem [resolvable:$true] %s24
      %30 = dma.hbm_to_vmem [thread:$0]  %s0, 96, %s25, [#allocation3], 32, 32, 2
    $region5: #{entnet_forward.1} parent=1 // pred_fallthru
      _
    // Predicated region
    $region6: #{entnet_forward.1} parent=1 // pred_check
      _
    $region7: #{entnet_forward.1} parent=1 // pred_check_branch
      %32 = sbr.rel (0) target = $region9
    $region8: #{entnet_forward.1} parent=1 // pred_region
      %s34 = ssub.s32 128, 128
      %35 = vsyncadd [#allocation6], %s34
      %s36 = sshll.u32 [#allocation5], 4
      %s37 = int_to_ptr.vmem [resolvable:$true] %s36
      %42 = dma.hbm_to_vmem [thread:$0]  %s1, 128, %s37, [#allocation6], 64, 64, 4
    $region9: #{entnet_forward.1} parent=1 // pred_fallthru
      _
    // Predicated region
    $region10: #{entnet_forward.1} parent=1 // pred_check
      _
    $region11: #{entnet_forward.1} parent=1 // pred_check_branch
      %44 = sbr.rel (0) target = $region13
    $region12: #{entnet_forward.1} parent=1 // pred_region
      %s46 = ssub.s32 128, 128
      %47 = vsyncadd [#allocation6], %s46
      %s48 = sshll.u32 [#allocation7], 4
      %s49 = int_to_ptr.vmem [resolvable:$true] %s48
      %54 = dma.hbm_to_vmem [thread:$0]  %s2, 128, %s49, [#allocation6], 64, 64, 4
    $region13: #{entnet_forward.1} parent=1 // pred_fallthru
      _
    // Predicated region
    $region14: #{entnet_forward.1} parent=1 // pred_check
      _
    $region15: #{entnet_forward.1} parent=1 // pred_check_branch
      %56 = sbr.rel (0) target = $region17
    $region16: #{entnet_forward.1} parent=1 // pred_region
      %s58 = ssub.s32 512, 512
      %59 = vsyncadd [#allocation9], %s58
      %s60 = sshll.u32 [#allocation8], 4
      %s61 = int_to_ptr.vmem [resolvable:$true] %s60
      %66 = dma.hbm_to_vmem [thread:$0]  %s3, 512, %s61, [#allocation9], 128, 128, 8
    $region17: #{entnet_forward.1} parent=1 // pred_fallthru
      _
    // Predicated region
    $region18: #{entnet_forward.1} parent=1 // pred_check
      _
    $region19: #{entnet_forward.1} parent=1 // pred_check_branch
      %68 = sbr.rel (0) target = $region21
    $region20: #{entnet_forward.1} parent=1 // pred_region
      %s70 = ssub.s32 512, 512
      %71 = vsyncadd [#allocation9], %s70
      %s72 = sshll.u32 [#allocation10], 4
      %s73 = int_to_ptr.vmem [resolvable:$true] %s72
      %78 = dma.hbm_to_vmem [thread:$0]  %s4, 512, %s73, [#allocation9], 128, 128, 8
    $region21: #{entnet_forward.1} parent=1 // pred_fallthru
      _
    // Predicated region
    $region22: #{entnet_forward.1} parent=1 // pred_check
      _
    $region23: #{entnet_forward.1} parent=1 // pred_check_branch
      %80 = sbr.rel (0) target = $region25
    $region24: #{entnet_forward.1} parent=1 // pred_region
      %s82 = ssub.s32 512, 512
      %83 = vsyncadd [#allocation12], %s82
      %s84 = sshll.u32 [#allocation11], 4
      %s85 = int_to_ptr.vmem [resolvable:$true] %s84
      %90 = dma.hbm_to_vmem [thread:$0]  %s5, 512, %s85, [#allocation12], 128, 128, 8
    $region25: #{entnet_forward.1} parent=1 // pred_fallthru
      _
    // Predicated region
    $region26: #{entnet_forward.1} parent=1 // pred_check
      _
    $region27: #{entnet_forward.1} parent=1 // pred_check_branch
      %92 = sbr.rel (0) target = $region29
    $region28: #{entnet_forward.1} parent=1 // pred_region
      %93 = dma.done [#allocation3], 96
    $region29: #{entnet_forward.1} parent=1 // pred_fallthru
      _
    // Predicated region
    $region30: #{entnet_forward.1} parent=1 // pred_check
      _
    $region31: #{entnet_forward.1} parent=1 // pred_check_branch
      %95 = sbr.rel (0) target = $region33
    $region32: #{entnet_forward.1} parent=1 // pred_region
      %96 = dma.done [#allocation6], 128
    $region33: #{entnet_forward.1} parent=1 // pred_fallthru
      _
    // Predicated region
    $region34: #{entnet_forward.1} parent=1 // pred_check
      _
    $region35: #{entnet_forward.1} parent=1 // pred_check_branch
      %98 = sbr.rel (0) target = $region37
    $region36: #{entnet_forward.1} parent=1 // pred_region
      %99 = dma.done [#allocation6], 128
    $region37: #{entnet_forward.1} parent=1 // pred_fallthru
      _
    // Predicated region
    $region38: #{entnet_forward.1} parent=1 // pred_check
      _
    $region39: #{entnet_forward.1} parent=1 // pred_check_branch
      %101 = sbr.rel (0) target = $region41
    $region40: #{entnet_forward.1} parent=1 // pred_region
      %102 = dma.done [#allocation9], 512
    $region41: #{entnet_forward.1} parent=1 // pred_fallthru
      _
    // Predicated region
    $region42: #{entnet_forward.1} parent=1 // pred_check
      _
    $region43: #{entnet_forward.1} parent=1 // pred_check_branch
      %104 = sbr.rel (0) target = $region45
    $region44: #{entnet_forward.1} parent=1 // pred_region
      %105 = dma.done [#allocation9], 512
    $region45: #{entnet_forward.1} parent=1 // pred_fallthru
      _
    // Predicated region
    $region46: #{entnet_forward.1} parent=1 // pred_check
      _
    $region47: #{entnet_forward.1} parent=1 // pred_check_branch
      %107 = sbr.rel (0) target = $region49
    $region48: #{entnet_forward.1} parent=1 // pred_region
      %108 = dma.done [#allocation12], 512
    $region49: #{entnet_forward.1} parent=1 // pred_fallthru
      _
    %v109 = vld [vmem:[#allocation2] sm:$0x3]
    %v110 = vld [vmem:[#allocation2 + $0x2] sm:$0x3]
    %v111 = vld [vmem:[#allocation2 + $0x4] sm:$0x3]
    %v112 = vld [vmem:[#allocation5] sm:$0xf]
    %v113 = vld [vmem:[#allocation5 + $0x4] sm:$0xf]
    %v114 = vld [vmem:[#allocation7] sm:$0xf]
    %v115 = vld [vmem:[#allocation7 + $0x4] sm:$0xf]
    %v116 = vld [vmem:[#allocation8] sm:$0xff]
    %v117 = vld [vmem:[#allocation8 + $0x8] sm:$0xff]
    %v118 = vld [vmem:[#allocation8 + $0x10] sm:$0xff]
    %v119 = vld [vmem:[#allocation8 + $0x18] sm:$0xff]
    %v120 = vld [vmem:[#allocation10] sm:$0xff]
    %v121 = vld [vmem:[#allocation10 + $0x8] sm:$0xff]
    %v122 = vld [vmem:[#allocation10 + $0x10] sm:$0xff]
    %v123 = vld [vmem:[#allocation10 + $0x18] sm:$0xff]
    %v124 = vld [vmem:[#allocation11] sm:$0xff]
    %v125 = vld [vmem:[#allocation11 + $0x8] sm:$0xff]
    %v126 = vld [vmem:[#allocation11 + $0x10] sm:$0xff]
    %v127 = vld [vmem:[#allocation11 + $0x18] sm:$0xff]
    %v130 = vcombine.low %v112, %v113
    %vm131 = vcmask 261120
    %v132 = vsel %vm131, %v130, 0
    %134 = vmatprep.subr.mxu0 0.0
    %135 = vmatpush1.msra.mxu0 0.0
    %136 = vmatprep.subr.mxu0 0.0
    %137 = vmatpush1.msra.mxu0 0.0
    %138 = vmatprep.subr.mxu0 0.0
    %139 = vmatpush1.msra.mxu0 0.0
    %140 = vmatprep.subr.mxu0 0.0
    %141 = vmatpush1.msra.mxu0 0.0
    %142 = vmatprep.subr.mxu0 0.0
    %143 = vmatpush1.msra.mxu0 0.0
    %144 = vmatprep.subr.mxu0 0.0
    %145 = vmatpush1.msra.mxu0 0.0
    %146 = vmatprep.subr.mxu0 0.0
    %147 = vmatpush1.msra.mxu0 0.0
    %148 = vmatprep.subr.mxu0 0.0
    %149 = vmatpush1.msra.mxu0 0.0
    %150 = vmatprep.subr.mxu0 0.0
    %151 = vmatpush1.msra.mxu0 0.0
    %152 = vmatprep.subr.mxu0 0.0
    %153 = vmatpush1.msra.mxu0 0.0
    %154 = vmatprep.subr.mxu0 0.0
    %155 = vmatpush1.msra.mxu0 0.0
    %156 = vmatprep.subr.mxu0 0.0
    %157 = vmatpush1.msra.mxu0 0.0
    %158 = vmatprep.subr.mxu0 0.0
    %159 = vmatpush1.msra.mxu0 %v123
    %160 = vmatprep.subr.mxu0 0.0
    %161 = vmatpush1.msra.mxu0 %v122
    %162 = vmatprep.subr.mxu0 0.0
    %163 = vmatpush1.msra.mxu0 %v121
    %164 = vmatprep.subr.mxu0 0.0
    %165 = vmatpush1.msra.mxu0 %v120
    %166 = vmatprep.subr.mxu0 0.0
    %167 = vmatpush2.msra.mxu0 0.0
    %168 = vmatprep.subr.mxu0 0.0
    %169 = vmatpush2.msra.mxu0 0.0
    %170 = vmatprep.subr.mxu0 0.0
    %171 = vmatpush2.msra.mxu0 0.0
    %172 = vmatprep.subr.mxu0 0.0
    %173 = vmatpush2.msra.mxu0 0.0
    %174 = vmatprep.subr.mxu0 0.0
    %175 = vmatpush2.msra.mxu0 0.0
    %176 = vmatprep.subr.mxu0 0.0
    %177 = vmatpush2.msra.mxu0 0.0
    %178 = vmatprep.subr.mxu0 0.0
    %179 = vmatpush2.msra.mxu0 0.0
    %180 = vmatprep.subr.mxu0 0.0
    %181 = vmatpush2.msra.mxu0 0.0
    %182 = vmatprep.subr.mxu0 0.0
    %183 = vmatpush2.msra.mxu0 0.0
    %184 = vmatprep.subr.mxu0 0.0
    %185 = vmatpush2.msra.mxu0 0.0
    %186 = vmatprep.subr.mxu0 0.0
    %187 = vmatpush2.msra.mxu0 0.0
    %188 = vmatprep.subr.mxu0 0.0
    %189 = vmatpush2.msra.mxu0 0.0
    %190 = vmatprep.subr.mxu0 0.0
    %191 = vmatpush2.msra.mxu0 0.0
    %192 = vmatprep.subr.mxu0 0.0
    %193 = vmatpush2.msra.mxu0 0.0
    %194 = vmatprep.subr.mxu0 0.0
    %195 = vmatpush2.msra.mxu0 0.0
    %196 = vmatprep.subr.mxu0 0.0
    %197 = vmatpush2.msra.mxu0 0.0
    %198 = vmatprep.mubr.f32.mxu0 0.0
    %199 = vmatmul.mubr.f32.gmra.mxu0 %v132
    %v200 = vpop.f32.mrf.mxu0
    %v201 = vadd.f32 0.0, %v200
    %v202 = vpop.f32.mrf.mxu0
    %203 = vdwg.mxu0
    %v205 = vcombine.high %v201, %v201
    %v210 = vcombine.low %v109, %v110
    %v212 = vunpack.c.l.s4 1983009808
    %v213 = vunpack.c.0.s8 %v212
    %v214 = vlaneseq
    %v215 = vshrl.u32 %v214, 7
    %v216 = vsub.s32 %v213, %v215
    %v217 = vrot.slane %v210, %v216
    %v219 = vunpack.c.l.s4 1983009808
    %v220 = vunpack.c.0.s8 %v219
    %v221 = vlaneseq
    %v222 = vshrl.u32 %v221, 7
    %v223 = vsub.s32 %v220, %v222
    %v224 = vrot.slane %v111, %v223
    %v225 = vcombine.low %v217, %v224
    %v226 = vsel %vm131, %v225, 0
    %228 = vmatprep.subr.mxu0 0.0
    %229 = vmatpush1.msra.mxu0 0.0
    %230 = vmatprep.subr.mxu0 0.0
    %231 = vmatpush1.msra.mxu0 0.0
    %232 = vmatprep.subr.mxu0 0.0
    %233 = vmatpush1.msra.mxu0 0.0
    %234 = vmatprep.subr.mxu0 0.0
    %235 = vmatpush1.msra.mxu0 0.0
    %236 = vmatprep.subr.mxu0 0.0
    %237 = vmatpush1.msra.mxu0 0.0
    %238 = vmatprep.subr.mxu0 0.0
    %239 = vmatpush1.msra.mxu0 0.0
    %240 = vmatprep.subr.mxu0 0.0
    %241 = vmatpush1.msra.mxu0 0.0
    %242 = vmatprep.subr.mxu0 0.0
    %243 = vmatpush1.msra.mxu0 0.0
    %244 = vmatprep.subr.mxu0 0.0
    %245 = vmatpush1.msra.mxu0 0.0
    %246 = vmatprep.subr.mxu0 0.0
    %247 = vmatpush1.msra.mxu0 0.0
    %248 = vmatprep.subr.mxu0 0.0
    %249 = vmatpush1.msra.mxu0 0.0
    %250 = vmatprep.subr.mxu0 0.0
    %251 = vmatpush1.msra.mxu0 0.0
    %252 = vmatprep.subr.mxu0 0.0
    %253 = vmatpush1.msra.mxu0 %v127
    %254 = vmatprep.subr.mxu0 0.0
    %255 = vmatpush1.msra.mxu0 %v126
    %256 = vmatprep.subr.mxu0 0.0
    %257 = vmatpush1.msra.mxu0 %v125
    %258 = vmatprep.subr.mxu0 0.0
    %259 = vmatpush1.msra.mxu0 %v124
    %260 = vmatprep.subr.mxu0 0.0
    %261 = vmatpush2.msra.mxu0 0.0
    %262 = vmatprep.subr.mxu0 0.0
    %263 = vmatpush2.msra.mxu0 0.0
    %264 = vmatprep.subr.mxu0 0.0
    %265 = vmatpush2.msra.mxu0 0.0
    %266 = vmatprep.subr.mxu0 0.0
    %267 = vmatpush2.msra.mxu0 0.0
    %268 = vmatprep.subr.mxu0 0.0
    %269 = vmatpush2.msra.mxu0 0.0
    %270 = vmatprep.subr.mxu0 0.0
    %271 = vmatpush2.msra.mxu0 0.0
    %272 = vmatprep.subr.mxu0 0.0
    %273 = vmatpush2.msra.mxu0 0.0
    %274 = vmatprep.subr.mxu0 0.0
    %275 = vmatpush2.msra.mxu0 0.0
    %276 = vmatprep.subr.mxu0 0.0
    %277 = vmatpush2.msra.mxu0 0.0
    %278 = vmatprep.subr.mxu0 0.0
    %279 = vmatpush2.msra.mxu0 0.0
    %280 = vmatprep.subr.mxu0 0.0
    %281 = vmatpush2.msra.mxu0 0.0
    %282 = vmatprep.subr.mxu0 0.0
    %283 = vmatpush2.msra.mxu0 0.0
    %284 = vmatprep.subr.mxu0 0.0
    %285 = vmatpush2.msra.mxu0 0.0
    %286 = vmatprep.subr.mxu0 0.0
    %287 = vmatpush2.msra.mxu0 0.0
    %288 = vmatprep.subr.mxu0 0.0
    %289 = vmatpush2.msra.mxu0 0.0
    %290 = vmatprep.subr.mxu0 0.0
    %291 = vmatpush2.msra.mxu0 0.0
    %292 = vmatprep.mubr.f32.mxu0 0.0
    %293 = vmatmul.mubr.f32.gmra.mxu0 %v226
    %v294 = vpop.f32.mrf.mxu0
    %v295 = vadd.f32 0.0, %v294
    %v296 = vpop.f32.mrf.mxu0
    %297 = vdwg.mxu0
    %v299 = vcombine.high %v295, %v295
    %v301 = vunpack.c.l.s4 1983009808
    %v302 = vunpack.c.0.s8 %v301
    %v303 = vlaneseq
    %v304 = vshrl.u32 %v303, 7
    %v305 = vsub.s32 %v302, %v304
    %v306 = vrot.slane %v295, %v305
    %v308 = vunpack.c.l.s4 1983009808
    %v309 = vunpack.c.0.s8 %v308
    %v310 = vlaneseq
    %v311 = vshrl.u32 %v310, 7
    %v312 = vsub.s32 %v309, %v311
    %v313 = vrot.slane %v299, %v312
    %v314 = vcombine.high %v306, %v306
    %v316 = vunpack.c.l.s4 1966171168
    %v317 = vunpack.c.0.s8 %v316
    %v318 = vlaneseq
    %v319 = vshrl.u32 %v318, 7
    %v320 = vsub.s32 %v317, %v319
    %v321 = vrot.slane %v109, %v320
    %v322 = vcombine.high %v321, %v321
    %v324 = vunpack.c.l.s4 1966171168
    %v325 = vunpack.c.0.s8 %v324
    %v326 = vlaneseq
    %v327 = vshrl.u32 %v326, 7
    %v328 = vsub.s32 %v325, %v327
    %v329 = vrot.slane %v321, %v328
    %v331 = vunpack.c.l.s4 1966171168
    %v332 = vunpack.c.0.s8 %v331
    %v333 = vlaneseq
    %v334 = vshrl.u32 %v333, 7
    %v335 = vsub.s32 %v332, %v334
    %v336 = vrot.slane %v322, %v335
    %v337 = vlaneseq
    %v338 = vshrl.u32 %v337, 7
    %v339 = vsub.s32 0, %v338
    %v340 = vrot.slane %v329, %v339
    %v341 = vlaneseq
    %v342 = vshrl.u32 %v341, 7
    %v343 = vsub.s32 0, %v342
    %v344 = vrot.slane %v336, %v343
    %v347 = vmul.f32 %v340, %v112
    %v348 = vmul.f32 %v344, %v113
    %vm349 = vcmask 257024
    %v350 = vsel %vm349, %v347, 0.0
    %351 = vadd.xlane.f32.xlu0 %v350
    %v352 = vpop.xlane.xlu0 %351
    %v353 = vsel %vm349, %v348, 0.0
    %354 = vadd.xlane.f32.xlu0 %v353
    %v355 = vpop.xlane.xlu0 %354
    %v357 = vunpack.c.l.s4 1966171168
    %v358 = vunpack.c.0.s8 %v357
    %v359 = vlaneseq
    %v360 = vshrl.u32 %v359, 7
    %v361 = vsub.s32 %v358, %v360
    %v362 = vrot.slane %v110, %v361
    %v363 = vcombine.high %v362, %v362
    %v365 = vunpack.c.l.s4 1966171168
    %v366 = vunpack.c.0.s8 %v365
    %v367 = vlaneseq
    %v368 = vshrl.u32 %v367, 7
    %v369 = vsub.s32 %v366, %v368
    %v370 = vrot.slane %v362, %v369
    %v372 = vunpack.c.l.s4 1966171168
    %v373 = vunpack.c.0.s8 %v372
    %v374 = vlaneseq
    %v375 = vshrl.u32 %v374, 7
    %v376 = vsub.s32 %v373, %v375
    %v377 = vrot.slane %v363, %v376
    %v378 = vlaneseq
    %v379 = vshrl.u32 %v378, 7
    %v380 = vsub.s32 0, %v379
    %v381 = vrot.slane %v370, %v380
    %v382 = vlaneseq
    %v383 = vshrl.u32 %v382, 7
    %v384 = vsub.s32 0, %v383
    %v385 = vrot.slane %v377, %v384
    %v388 = vmul.f32 %v381, %v112
    %v389 = vmul.f32 %v385, %v113
    %v390 = vsel %vm349, %v388, 0.0
    %391 = vadd.xlane.f32.xlu0 %v390
    %v392 = vpop.xlane.xlu0 %391
    %v393 = vsel %vm349, %v389, 0.0
    %394 = vadd.xlane.f32.xlu0 %v393
    %v395 = vpop.xlane.xlu0 %394
    %v397 = vunpack.c.l.s4 1966171168
    %v398 = vunpack.c.0.s8 %v397
    %v399 = vlaneseq
    %v400 = vshrl.u32 %v399, 7
    %v401 = vsub.s32 %v398, %v400
    %v402 = vrot.slane %v111, %v401
    %v403 = vcombine.high %v402, %v402
    %v405 = vunpack.c.l.s4 1966171168
    %v406 = vunpack.c.0.s8 %v405
    %v407 = vlaneseq
    %v408 = vshrl.u32 %v407, 7
    %v409 = vsub.s32 %v406, %v408
    %v410 = vrot.slane %v402, %v409
    %v412 = vunpack.c.l.s4 1966171168
    %v413 = vunpack.c.0.s8 %v412
    %v414 = vlaneseq
    %v415 = vshrl.u32 %v414, 7
    %v416 = vsub.s32 %v413, %v415
    %v417 = vrot.slane %v403, %v416
    %v418 = vlaneseq
    %v419 = vshrl.u32 %v418, 7
    %v420 = vsub.s32 0, %v419
    %v421 = vrot.slane %v410, %v420
    %v422 = vlaneseq
    %v423 = vshrl.u32 %v422, 7
    %v424 = vsub.s32 0, %v423
    %v425 = vrot.slane %v417, %v424
    %v428 = vmul.f32 %v421, %v112
    %v429 = vmul.f32 %v425, %v113
    %v430 = vsel %vm349, %v428, 0.0
    %431 = vadd.xlane.f32.xlu0 %v430
    %v432 = vpop.xlane.xlu0 %431
    %v433 = vsel %vm349, %v429, 0.0
    %434 = vadd.xlane.f32.xlu0 %v433
    %v435 = vpop.xlane.xlu0 %434
    %v436 = vmul.f32 %v340, %v114
    %v437 = vmul.f32 %v344, %v115
    %v438 = vsel %vm349, %v436, 0.0
    %439 = vadd.xlane.f32.xlu0 %v438
    %v440 = vpop.xlane.xlu0 %439
    %v441 = vsel %vm349, %v437, 0.0
    %442 = vadd.xlane.f32.xlu0 %v441
    %v443 = vpop.xlane.xlu0 %442
    %v444 = vadd.f32 %v440, %v352
    %v445 = vadd.f32 %v443, %v355
    %v446 = vxor.u32 %v444, 2147483648
    %v447 = vxor.u32 %v445, 2147483648
    %v448 = vmul.f32 %v446, 1.442695
    %v449 = vpow.pop %v448
    %v450 = vmul.f32 %v447, 1.442695
    %v451 = vpow.pop %v450
    %v452 = vadd.f32 %v449, 1.0
    %v453 = vadd.f32 %v451, 1.0
    %v454 = vrcp.pop %v452
    %v455 = vmul.f32 1.0, %v454
    %v456 = vrcp.pop %v453
    %v457 = vmul.f32 1.0, %v456
    %v460 = vcombine.low %v114, %v115
    %v461 = vsel %vm131, %v460, 0
    %463 = vmatprep.subr.mxu0 0.0
    %464 = vmatpush1.msra.mxu0 0.0
    %465 = vmatprep.subr.mxu0 0.0
    %466 = vmatpush1.msra.mxu0 0.0
    %467 = vmatprep.subr.mxu0 0.0
    %468 = vmatpush1.msra.mxu0 0.0
    %469 = vmatprep.subr.mxu0 0.0
    %470 = vmatpush1.msra.mxu0 0.0
    %471 = vmatprep.subr.mxu0 0.0
    %472 = vmatpush1.msra.mxu0 0.0
    %473 = vmatprep.subr.mxu0 0.0
    %474 = vmatpush1.msra.mxu0 0.0
    %475 = vmatprep.subr.mxu0 0.0
    %476 = vmatpush1.msra.mxu0 0.0
    %477 = vmatprep.subr.mxu0 0.0
    %478 = vmatpush1.msra.mxu0 0.0
    %479 = vmatprep.subr.mxu0 0.0
    %480 = vmatpush1.msra.mxu0 0.0
    %481 = vmatprep.subr.mxu0 0.0
    %482 = vmatpush1.msra.mxu0 0.0
    %483 = vmatprep.subr.mxu0 0.0
    %484 = vmatpush1.msra.mxu0 0.0
    %485 = vmatprep.subr.mxu0 0.0
    %486 = vmatpush1.msra.mxu0 0.0
    %487 = vmatprep.subr.mxu0 0.0
    %488 = vmatpush1.msra.mxu0 %v119
    %489 = vmatprep.subr.mxu0 0.0
    %490 = vmatpush1.msra.mxu0 %v118
    %491 = vmatprep.subr.mxu0 0.0
    %492 = vmatpush1.msra.mxu0 %v117
    %493 = vmatprep.subr.mxu0 0.0
    %494 = vmatpush1.msra.mxu0 %v116
    %495 = vmatprep.subr.mxu0 0.0
    %496 = vmatpush2.msra.mxu0 0.0
    %497 = vmatprep.subr.mxu0 0.0
    %498 = vmatpush2.msra.mxu0 0.0
    %499 = vmatprep.subr.mxu0 0.0
    %500 = vmatpush2.msra.mxu0 0.0
    %501 = vmatprep.subr.mxu0 0.0
    %502 = vmatpush2.msra.mxu0 0.0
    %503 = vmatprep.subr.mxu0 0.0
    %504 = vmatpush2.msra.mxu0 0.0
    %505 = vmatprep.subr.mxu0 0.0
    %506 = vmatpush2.msra.mxu0 0.0
    %507 = vmatprep.subr.mxu0 0.0
    %508 = vmatpush2.msra.mxu0 0.0
    %509 = vmatprep.subr.mxu0 0.0
    %510 = vmatpush2.msra.mxu0 0.0
    %511 = vmatprep.subr.mxu0 0.0
    %512 = vmatpush2.msra.mxu0 0.0
    %513 = vmatprep.subr.mxu0 0.0
    %514 = vmatpush2.msra.mxu0 0.0
    %515 = vmatprep.subr.mxu0 0.0
    %516 = vmatpush2.msra.mxu0 0.0
    %517 = vmatprep.subr.mxu0 0.0
    %518 = vmatpush2.msra.mxu0 0.0
    %519 = vmatprep.subr.mxu0 0.0
    %520 = vmatpush2.msra.mxu0 0.0
    %521 = vmatprep.subr.mxu0 0.0
    %522 = vmatpush2.msra.mxu0 0.0
    %523 = vmatprep.subr.mxu0 0.0
    %524 = vmatpush2.msra.mxu0 0.0
    %525 = vmatprep.subr.mxu0 0.0
    %526 = vmatpush2.msra.mxu0 0.0
    %527 = vmatprep.mubr.f32.mxu0 0.0
    %528 = vmatmul.mubr.f32.gmra.mxu0 %v461
    %v529 = vpop.f32.mrf.mxu0
    %v530 = vadd.f32 0.0, %v529
    %v531 = vpop.f32.mrf.mxu0
    %532 = vdwg.mxu0
    %v534 = vcombine.high %v530, %v530
    %v536 = vadd.f32 %v530, %v201
    %v537 = vadd.f32 %v534, %v205
    %v539 = vunpack.c.l.s4 1966171168
    %v540 = vunpack.c.0.s8 %v539
    %v541 = vlaneseq
    %v542 = vshrl.u32 %v541, 7
    %v543 = vsub.s32 %v540, %v542
    %v544 = vrot.slane %v306, %v543
    %v545 = vcombine.high %v544, %v544
    %v546 = vlaneseq
    %v547 = vshrl.u32 %v546, 7
    %v548 = vsub.s32 0, %v547
    %v549 = vrot.slane %v544, %v548
    %v550 = vlaneseq
    %v551 = vshrl.u32 %v550, 7
    %v552 = vsub.s32 0, %v551
    %v553 = vrot.slane %v545, %v552
    %v556 = vadd.f32 %v536, %v549
    %v557 = vadd.f32 %v537, %v553
    %vm558 = vcmp.gt.f32.partialorder %v556, 0.0
    %vm559 = vcmp.gt.f32.partialorder %v557, 0.0
    %v560 = vmul.f32 %v556, 0.25
    %v561 = vmul.f32 %v557, 0.25
    %v562 = vsel %vm558, %v556, %v560
    %v563 = vsel %vm559, %v557, %v561
    %v564 = vmul.f32 %v455, %v562
    %v565 = vmul.f32 %v457, %v563
    %v566 = vadd.f32 %v114, %v564
    %v567 = vadd.f32 %v115, %v565
    %v568 = vmul.f32 %v566, %v566
    %v569 = vmul.f32 %v567, %v567
    %v570 = vsel %vm349, %v568, 0.0
    %571 = vadd.xlane.f32.xlu0 %v570
    %v572 = vpop.xlane.xlu0 %571
    %v573 = vsel %vm349, %v569, 0.0
    %574 = vadd.xlane.f32.xlu0 %v573
    %v575 = vpop.xlane.xlu0 %574
    %v576 = vadd.f32 %v572, 1e-08
    %v577 = vadd.f32 %v575, 1e-08
    %v578 = vrsqrt.pop %v576
    %v579 = vrsqrt.pop %v577
    %v580 = vmul.f32 %v566, %v578
    %v581 = vmul.f32 %v567, %v579
    %v582 = vmul.f32 %v381, %v580
    %v583 = vmul.f32 %v385, %v581
    %v584 = vsel %vm349, %v582, 0.0
    %585 = vadd.xlane.f32.xlu0 %v584
    %v586 = vpop.xlane.xlu0 %585
    %v587 = vsel %vm349, %v583, 0.0
    %588 = vadd.xlane.f32.xlu0 %v587
    %v589 = vpop.xlane.xlu0 %588
    %v590 = vadd.f32 %v586, %v392
    %v591 = vadd.f32 %v589, %v395
    %v592 = vxor.u32 %v590, 2147483648
    %v593 = vxor.u32 %v591, 2147483648
    %v594 = vmul.f32 %v592, 1.442695
    %v595 = vpow.pop %v594
    %v596 = vmul.f32 %v593, 1.442695
    %v597 = vpow.pop %v596
    %v598 = vadd.f32 %v595, 1.0
    %v599 = vadd.f32 %v597, 1.0
    %v600 = vrcp.pop %v598
    %v601 = vmul.f32 1.0, %v600
    %v602 = vrcp.pop %v599
    %v603 = vmul.f32 1.0, %v602
    %v606 = vcombine.low %v580, %v581
    %v607 = vsel %vm131, %v606, 0
    %609 = vmatprep.subr.mxu0 0.0
    %610 = vmatpush1.msra.mxu0 0.0
    %611 = vmatprep.subr.mxu0 0.0
    %612 = vmatpush1.msra.mxu0 0.0
    %613 = vmatprep.subr.mxu0 0.0
    %614 = vmatpush1.msra.mxu0 0.0
    %615 = vmatprep.subr.mxu0 0.0
    %616 = vmatpush1.msra.mxu0 0.0
    %617 = vmatprep.subr.mxu0 0.0
    %618 = vmatpush1.msra.mxu0 0.0
    %619 = vmatprep.subr.mxu0 0.0
    %620 = vmatpush1.msra.mxu0 0.0
    %621 = vmatprep.subr.mxu0 0.0
    %622 = vmatpush1.msra.mxu0 0.0
    %623 = vmatprep.subr.mxu0 0.0
    %624 = vmatpush1.msra.mxu0 0.0
    %625 = vmatprep.subr.mxu0 0.0
    %626 = vmatpush1.msra.mxu0 0.0
    %627 = vmatprep.subr.mxu0 0.0
    %628 = vmatpush1.msra.mxu0 0.0
    %629 = vmatprep.subr.mxu0 0.0
    %630 = vmatpush1.msra.mxu0 0.0
    %631 = vmatprep.subr.mxu0 0.0
    %632 = vmatpush1.msra.mxu0 0.0
    %633 = vmatprep.subr.mxu0 0.0
    %634 = vmatpush1.msra.mxu0 %v119
    %635 = vmatprep.subr.mxu0 0.0
    %636 = vmatpush1.msra.mxu0 %v118
    %637 = vmatprep.subr.mxu0 0.0
    %638 = vmatpush1.msra.mxu0 %v117
    %639 = vmatprep.subr.mxu0 0.0
    %640 = vmatpush1.msra.mxu0 %v116
    %641 = vmatprep.subr.mxu0 0.0
    %642 = vmatpush2.msra.mxu0 0.0
    %643 = vmatprep.subr.mxu0 0.0
    %644 = vmatpush2.msra.mxu0 0.0
    %645 = vmatprep.subr.mxu0 0.0
    %646 = vmatpush2.msra.mxu0 0.0
    %647 = vmatprep.subr.mxu0 0.0
    %648 = vmatpush2.msra.mxu0 0.0
    %649 = vmatprep.subr.mxu0 0.0
    %650 = vmatpush2.msra.mxu0 0.0
    %651 = vmatprep.subr.mxu0 0.0
    %652 = vmatpush2.msra.mxu0 0.0
    %653 = vmatprep.subr.mxu0 0.0
    %654 = vmatpush2.msra.mxu0 0.0
    %655 = vmatprep.subr.mxu0 0.0
    %656 = vmatpush2.msra.mxu0 0.0
    %657 = vmatprep.subr.mxu0 0.0
    %658 = vmatpush2.msra.mxu0 0.0
    %659 = vmatprep.subr.mxu0 0.0
    %660 = vmatpush2.msra.mxu0 0.0
    %661 = vmatprep.subr.mxu0 0.0
    %662 = vmatpush2.msra.mxu0 0.0
    %663 = vmatprep.subr.mxu0 0.0
    %664 = vmatpush2.msra.mxu0 0.0
    %665 = vmatprep.subr.mxu0 0.0
    %666 = vmatpush2.msra.mxu0 0.0
    %667 = vmatprep.subr.mxu0 0.0
    %668 = vmatpush2.msra.mxu0 0.0
    %669 = vmatprep.subr.mxu0 0.0
    %670 = vmatpush2.msra.mxu0 0.0
    %671 = vmatprep.subr.mxu0 0.0
    %672 = vmatpush2.msra.mxu0 0.0
    %673 = vmatprep.mubr.f32.mxu0 0.0
    %674 = vmatmul.mubr.f32.gmra.mxu0 %v607
    %v675 = vpop.f32.mrf.mxu0
    %v676 = vadd.f32 0.0, %v675
    %v677 = vpop.f32.mrf.mxu0
    %678 = vdwg.mxu0
    %v680 = vcombine.high %v676, %v676
    %v682 = vadd.f32 %v676, %v201
    %v683 = vadd.f32 %v680, %v205
    %v685 = vunpack.c.l.s4 1966171168
    %v686 = vunpack.c.0.s8 %v685
    %v687 = vlaneseq
    %v688 = vshrl.u32 %v687, 7
    %v689 = vsub.s32 %v686, %v688
    %v690 = vrot.slane %v314, %v689
    %v691 = vcombine.high %v690, %v690
    %v692 = vlaneseq
    %v693 = vshrl.u32 %v692, 7
    %v694 = vsub.s32 0, %v693
    %v695 = vrot.slane %v690, %v694
    %v696 = vlaneseq
    %v697 = vshrl.u32 %v696, 7
    %v698 = vsub.s32 0, %v697
    %v699 = vrot.slane %v691, %v698
    %v702 = vadd.f32 %v682, %v695
    %v703 = vadd.f32 %v683, %v699
    %vm704 = vcmp.gt.f32.partialorder %v702, 0.0
    %vm705 = vcmp.gt.f32.partialorder %v703, 0.0
    %v706 = vmul.f32 %v702, 0.25
    %v707 = vmul.f32 %v703, 0.25
    %v708 = vsel %vm704, %v702, %v706
    %v709 = vsel %vm705, %v703, %v707
    %v710 = vmul.f32 %v601, %v708
    %v711 = vmul.f32 %v603, %v709
    %v712 = vadd.f32 %v580, %v710
    %v713 = vadd.f32 %v581, %v711
    %v714 = vmul.f32 %v712, %v712
    %v715 = vmul.f32 %v713, %v713
    %v716 = vsel %vm349, %v714, 0.0
    %717 = vadd.xlane.f32.xlu0 %v716
    %v718 = vpop.xlane.xlu0 %717
    %v719 = vsel %vm349, %v715, 0.0
    %720 = vadd.xlane.f32.xlu0 %v719
    %v721 = vpop.xlane.xlu0 %720
    %v722 = vadd.f32 %v718, 1e-08
    %v723 = vadd.f32 %v721, 1e-08
    %v724 = vrsqrt.pop %v722
    %v725 = vrsqrt.pop %v723
    %v726 = vmul.f32 %v712, %v724
    %v727 = vmul.f32 %v713, %v725
    %v728 = vmul.f32 %v421, %v726
    %v729 = vmul.f32 %v425, %v727
    %v730 = vsel %vm349, %v728, 0.0
    %731 = vadd.xlane.f32.xlu0 %v730
    %v732 = vpop.xlane.xlu0 %731
    %v733 = vsel %vm349, %v729, 0.0
    %734 = vadd.xlane.f32.xlu0 %v733
    %v735 = vpop.xlane.xlu0 %734
    %v736 = vadd.f32 %v732, %v432
    %v737 = vadd.f32 %v735, %v435
    %v738 = vxor.u32 %v736, 2147483648
    %v739 = vxor.u32 %v737, 2147483648
    %v740 = vmul.f32 %v738, 1.442695
    %v741 = vpow.pop %v740
    %v742 = vmul.f32 %v739, 1.442695
    %v743 = vpow.pop %v742
    %v744 = vadd.f32 %v741, 1.0
    %v745 = vadd.f32 %v743, 1.0
    %v746 = vrcp.pop %v744
    %v747 = vmul.f32 1.0, %v746
    %v748 = vrcp.pop %v745
    %v749 = vmul.f32 1.0, %v748
    %v752 = vcombine.low %v726, %v727
    %v753 = vsel %vm131, %v752, 0
    %755 = vmatprep.subr.mxu0 0.0
    %756 = vmatpush1.msra.mxu0 0.0
    %757 = vmatprep.subr.mxu0 0.0
    %758 = vmatpush1.msra.mxu0 0.0
    %759 = vmatprep.subr.mxu0 0.0
    %760 = vmatpush1.msra.mxu0 0.0
    %761 = vmatprep.subr.mxu0 0.0
    %762 = vmatpush1.msra.mxu0 0.0
    %763 = vmatprep.subr.mxu0 0.0
    %764 = vmatpush1.msra.mxu0 0.0
    %765 = vmatprep.subr.mxu0 0.0
    %766 = vmatpush1.msra.mxu0 0.0
    %767 = vmatprep.subr.mxu0 0.0
    %768 = vmatpush1.msra.mxu0 0.0
    %769 = vmatprep.subr.mxu0 0.0
    %770 = vmatpush1.msra.mxu0 0.0
    %771 = vmatprep.subr.mxu0 0.0
    %772 = vmatpush1.msra.mxu0 0.0
    %773 = vmatprep.subr.mxu0 0.0
    %774 = vmatpush1.msra.mxu0 0.0
    %775 = vmatprep.subr.mxu0 0.0
    %776 = vmatpush1.msra.mxu0 0.0
    %777 = vmatprep.subr.mxu0 0.0
    %778 = vmatpush1.msra.mxu0 0.0
    %779 = vmatprep.subr.mxu0 0.0
    %780 = vmatpush1.msra.mxu0 %v119
    %781 = vmatprep.subr.mxu0 0.0
    %782 = vmatpush1.msra.mxu0 %v118
    %783 = vmatprep.subr.mxu0 0.0
    %784 = vmatpush1.msra.mxu0 %v117
    %785 = vmatprep.subr.mxu0 0.0
    %786 = vmatpush1.msra.mxu0 %v116
    %787 = vmatprep.subr.mxu0 0.0
    %788 = vmatpush2.msra.mxu0 0.0
    %789 = vmatprep.subr.mxu0 0.0
    %790 = vmatpush2.msra.mxu0 0.0
    %791 = vmatprep.subr.mxu0 0.0
    %792 = vmatpush2.msra.mxu0 0.0
    %793 = vmatprep.subr.mxu0 0.0
    %794 = vmatpush2.msra.mxu0 0.0
    %795 = vmatprep.subr.mxu0 0.0
    %796 = vmatpush2.msra.mxu0 0.0
    %797 = vmatprep.subr.mxu0 0.0
    %798 = vmatpush2.msra.mxu0 0.0
    %799 = vmatprep.subr.mxu0 0.0
    %800 = vmatpush2.msra.mxu0 0.0
    %801 = vmatprep.subr.mxu0 0.0
    %802 = vmatpush2.msra.mxu0 0.0
    %803 = vmatprep.subr.mxu0 0.0
    %804 = vmatpush2.msra.mxu0 0.0
    %805 = vmatprep.subr.mxu0 0.0
    %806 = vmatpush2.msra.mxu0 0.0
    %807 = vmatprep.subr.mxu0 0.0
    %808 = vmatpush2.msra.mxu0 0.0
    %809 = vmatprep.subr.mxu0 0.0
    %810 = vmatpush2.msra.mxu0 0.0
    %811 = vmatprep.subr.mxu0 0.0
    %812 = vmatpush2.msra.mxu0 0.0
    %813 = vmatprep.subr.mxu0 0.0
    %814 = vmatpush2.msra.mxu0 0.0
    %815 = vmatprep.subr.mxu0 0.0
    %816 = vmatpush2.msra.mxu0 0.0
    %817 = vmatprep.subr.mxu0 0.0
    %818 = vmatpush2.msra.mxu0 0.0
    %819 = vmatprep.mubr.f32.mxu0 0.0
    %820 = vmatmul.mubr.f32.gmra.mxu0 %v753
    %v821 = vpop.f32.mrf.mxu0
    %v822 = vadd.f32 0.0, %v821
    %v823 = vpop.f32.mrf.mxu0
    %824 = vdwg.mxu0
    %v826 = vcombine.high %v822, %v822
    %v828 = vadd.f32 %v822, %v201
    %v829 = vadd.f32 %v826, %v205
    %v831 = vunpack.c.l.s4 1966171168
    %v832 = vunpack.c.0.s8 %v831
    %v833 = vlaneseq
    %v834 = vshrl.u32 %v833, 7
    %v835 = vsub.s32 %v832, %v834
    %v836 = vrot.slane %v313, %v835
    %v837 = vcombine.high %v836, %v836
    %v838 = vlaneseq
    %v839 = vshrl.u32 %v838, 7
    %v840 = vsub.s32 0, %v839
    %v841 = vrot.slane %v836, %v840
    %v842 = vlaneseq
    %v843 = vshrl.u32 %v842, 7
    %v844 = vsub.s32 0, %v843
    %v845 = vrot.slane %v837, %v844
    %v848 = vadd.f32 %v828, %v841
    %v849 = vadd.f32 %v829, %v845
    %vm850 = vcmp.gt.f32.partialorder %v848, 0.0
    %vm851 = vcmp.gt.f32.partialorder %v849, 0.0
    %v852 = vmul.f32 %v848, 0.25
    %v853 = vmul.f32 %v849, 0.25
    %v854 = vsel %vm850, %v848, %v852
    %v855 = vsel %vm851, %v849, %v853
    %v856 = vmul.f32 %v747, %v854
    %v857 = vmul.f32 %v749, %v855
    %v858 = vadd.f32 %v726, %v856
    %v859 = vadd.f32 %v727, %v857
    %v860 = vmul.f32 %v858, %v858
    %v861 = vmul.f32 %v859, %v859
    %v862 = vsel %vm349, %v860, 0.0
    %863 = vadd.xlane.f32.xlu0 %v862
    %v864 = vpop.xlane.xlu0 %863
    %v865 = vsel %vm349, %v861, 0.0
    %866 = vadd.xlane.f32.xlu0 %v865
    %v867 = vpop.xlane.xlu0 %866
    %v868 = vadd.f32 %v864, 1e-08
    %v869 = vadd.f32 %v867, 1e-08
    %v870 = vrsqrt.pop %v868
    %v871 = vrsqrt.pop %v869
    %v872 = vmul.f32 %v858, %v870
    %v873 = vmul.f32 %v859, %v871
    %v876 = vlaneseq
    %v877 = vand.u32 %v876, 127
    %v878 = vlaneseq
    %v879 = vshrl.u32 %v878, 7
    %v880 = vsub.s32 %v877, %v879
    %v881 = vrot.slane %v736, %v880
    %v882 = vlaneseq
    %v883 = vshrl.u32 %v882, 7
    %v884 = vsub.s32 %v877, %v883
    %v885 = vrot.slane %v737, %v884
    %vm886 = vcmask 1041409
    %v887 = vsel %vm886, %v885, %v881
    %vm889 = vcmask 25600
    %v890 = vsel %vm889, %v887, -inf
    %891 = vmax.xlane.f32.xlu0 %v890
    %v892 = vpop.xlane.xlu0 %891
    %v894 = vlaneseq
    %v895 = vshrl.u32 %v894, 7
    %v896 = vsub.s32 0, %v895
    %v897 = vrot.slane %v892, %v896
    %v898 = vlaneseq
    %v899 = vshrl.u32 %v898, 7
    %v900 = vsub.s32 1, %v899
    %v901 = vrot.slane %v892, %v900
    %v904 = vsub.f32 %v736, %v897
    %v905 = vsub.f32 %v737, %v901
    %v906 = vmul.f32 %v904, 1.442695
    %v907 = vpow.pop %v906
    %v908 = vmul.f32 %v905, 1.442695
    %v909 = vpow.pop %v908
    %912 = vset.pattern.permute.xlu0 0
    %913 = vperm.xlu0 %912, %v907
    %v914 = vpop.permute.xlu0 %913
    %915 = vset.pattern.permute.xlu0 0
    %916 = vperm.xlu0 %915, %v909
    %v917 = vpop.permute.xlu0 %916
    %v918 = vlaneseq
    %v919 = vshrl.u32 %v918, 7
    %v920 = vsub.s32 %v877, %v919
    %v921 = vrot.slane %v914, %v920
    %v922 = vlaneseq
    %v923 = vshrl.u32 %v922, 7
    %v924 = vsub.s32 %v877, %v923
    %v925 = vrot.slane %v917, %v924
    %v926 = vsel %vm886, %v925, %v921
    %v928 = vsel %vm889, %v926, 0.0
    %929 = vadd.xlane.f32.xlu0 %v928
    %v930 = vpop.xlane.xlu0 %929
    %v932 = vlaneseq
    %v933 = vshrl.u32 %v932, 7
    %v934 = vsub.s32 0, %v933
    %v935 = vrot.slane %v930, %v934
    %v936 = vlaneseq
    %v937 = vshrl.u32 %v936, 7
    %v938 = vsub.s32 1, %v937
    %v939 = vrot.slane %v930, %v938
    %v942 = vrcp.pop %v935
    %v943 = vmul.f32 %v907, %v942
    %v944 = vrcp.pop %v939
    %v945 = vmul.f32 %v909, %v944
    %946 = vst.msk [vmem:[#allocation13] sm:$0xf] %vm349, %v872
    %947 = vst.msk [vmem:[#allocation13 + $0x4] sm:$0xf] %vm349, %v873
    %949 = vset.pattern.permute.xlu0 0
    %950 = vperm.xlu0 %949, %v943
    %v951 = vpop.permute.xlu0 %950
    %954 = vset.pattern.permute.xlu0 0
    %955 = vperm.xlu0 %954, %v945
    %v956 = vpop.permute.xlu0 %955
    %v958 = vmul.f32 %v951, %v872
    %v959 = vmul.f32 %v956, %v873
    %v960 = vsel %vm349, %v958, 0.0
    %v961 = vrot.slane %v960, 4
    %v962 = vadd.f32 %v960, %v961
    %v963 = vrot.slane %v962, 2
    %v964 = vadd.f32 %v962, %v963
    %v965 = vrot.slane %v964, 1
    %v966 = vadd.f32 %v964, %v965
    %v967 = vsel %vm349, %v959, 0.0
    %v968 = vrot.slane %v967, 4
    %v969 = vadd.f32 %v967, %v968
    %v970 = vrot.slane %v969, 2
    %v971 = vadd.f32 %v969, %v970
    %v972 = vrot.slane %v971, 1
    %v973 = vadd.f32 %v971, %v972
    %v976 = vsel %vm886, %v973, %v966
    %vm978 = vcmask 254976
    %979 = vst.msk [vmem:[#allocation14] sm:$0x3] %vm978, %v976
    // Predicated region
    $region50: #{entnet_forward.1} parent=1 // pred_check
      _
    $region51: #{entnet_forward.1} parent=1 // pred_check_branch
      %981 = sbr.rel (0) target = $region53
    $region52: #{entnet_forward.1} parent=1 // pred_region
      %s983 = ssub.s32 128, 128
      %984 = vsyncadd [#allocation4], %s983
      %s985 = sshll.u32 [#allocation13], 4
      %s986 = int_to_ptr.vmem [resolvable:$true] %s985
      %991 = dma.vmem_to_hbm [thread:$0]  %s986, 128, %s6, [#allocation4], 64, 64, 4
    $region53: #{entnet_forward.1} parent=1 // pred_fallthru
      _
    // Predicated region
    $region54: #{entnet_forward.1} parent=1 // pred_check
      _
    $region55: #{entnet_forward.1} parent=1 // pred_check_branch
      %993 = sbr.rel (0) target = $region57
    $region56: #{entnet_forward.1} parent=1 // pred_region
      %s995 = ssub.s32 32, 32
      %996 = vsyncadd [#allocation15], %s995
      %s998 = sshll.u32 [#allocation14], 4
      %s999 = int_to_ptr.vmem [resolvable:$true] %s998
      %1001 = dma.vmem_to_hbm [thread:$0]  %s999, 32, %s7, [#allocation15]
    $region57: #{entnet_forward.1} parent=1 // pred_fallthru
      _
    // Predicated region
    $region58: #{entnet_forward.1} parent=1 // pred_check
      _
    $region59: #{entnet_forward.1} parent=1 // pred_check_branch
      %1003 = sbr.rel (0) target = $region61
    $region60: #{entnet_forward.1} parent=1 // pred_region
      %1004 = dma.done [#allocation4], 128
    $region61: #{entnet_forward.1} parent=1 // pred_fallthru
      _
    // Predicated region
    $region62: #{entnet_forward.1} parent=1 // pred_check
      _
    $region63: #{entnet_forward.1} parent=1 // pred_check_branch
      %1006 = sbr.rel (0) target = $region65
    $region64: #{entnet_forward.1} parent=1 // pred_region
      %1007 = dma.done [#allocation15], 32
    $region65: #{entnet_forward.1} parent=1 // pred_fallthru
      _
    %1008 = vsyncpa [#allocation3], 1
    %1009 = vsyncpa [#allocation6], 1
    %1010 = vsyncpa [#allocation9], 1
    %1011 = vsyncpa [#allocation12], 1
    %1012 = vsyncpa [#allocation4], 1
    %1013 = vsyncpa [#allocation15], 1

</llo_original>
